<compile_context>
chip_gen: v5e
topology: v5e:2x2
jax: 0.10.0
libtpu: 0.0.40
codegen_flags: <defaults>
</compile_context>

<pallas_src>
import functools

import jax
import jax.numpy as jnp
from jax.experimental import pallas as pl
from jax.experimental.pallas import tpu as pltpu

INPUT_DIM = 32
NUM_CLASSES = 7
HIDDEN = (256, 128, 64)
HIDDEN_PAD = 128        # layer-3 output padded 64 -> 128 (lane-dense intermediate)
OUT_PAD_SUB = 8         # logits padded 7 -> 8 sublanes (transposed output tile)
BN_EPS = 1e-5
TB_CAP = 2048           # max batch-tile rows (working set << 32 MiB scoped VMEM)


def _round_up(n, m):
    return ((n + m - 1) // m) * m


def _default_elem_dtype():
    """bf16 elementwise only where the VPU has a bf16 path (v6e / v7x)."""
    try:
        kind = jax.devices()[0].device_kind.lower().replace(" ", "")
    except Exception:  # pragma: no cover - be conservative if query fails
        return jnp.float32
    if ("v6" in kind) or ("v7" in kind) or ("tpu7" in kind):
        return jnp.bfloat16
    return jnp.float32


def _pick_batch_tile(B, tb=None):
    """Pick (tile_rows, padded_batch).

    - Tiny batches: one tile covering the (sublane-rounded) batch.
    - Larger batches: lane-aligned tiles (multiple of 128 so the transposed (8, tb)
      output store is legal and lane-dense), capped at TB_CAP, and sized so the
      grid keeps >= ~4 steps for v7x's two TensorCores.
    """
    if tb is not None:
        tb = max(128, _round_up(int(tb), 128))
        return tb, _round_up(B, tb)
    Bp8 = _round_up(B, 8)
    if Bp8 <= 256:
        return Bp8, Bp8
    tb = min(TB_CAP, max(128, _round_up(pl.cdiv(Bp8, 4), 128)))
    return tb, _round_up(B, tb)


def _mlp_kernel(x_ref,
                w1_ref, t1_ref,
                w2_ref, t2_ref,
                w3_ref, t3_ref,
                w4t_ref, b4t_ref,
                o_ref):
    # x_ref: (tb, INPUT_DIM) f32. Weights bf16 (BN pre-folded); t* shifts are f32 on
    # v5e and bf16 on v6e/v7x; head bias f32. Dropout is identity in eval mode.
    def act(acc_f32, t_ref):
        # Bias-add + ReLU in the shift dtype, then bf16 for the next MXU op.
        a = acc_f32.astype(t_ref.dtype)
        return jnp.maximum(a + t_ref[...], 0).astype(jnp.bfloat16)

    x = x_ref[...].astype(jnp.bfloat16)
    h = act(jnp.dot(x, w1_ref[...], preferred_element_type=jnp.float32), t1_ref)
    h = act(jnp.dot(h, w2_ref[...], preferred_element_type=jnp.float32), t2_ref)
    h = act(jnp.dot(h, w3_ref[...], preferred_element_type=jnp.float32), t3_ref)
    # Head computed transposed: (8, 128) contracted against h's last dim -> (8, tb).
    # Classes on sublanes, batch on lanes => lane-dense store, ~16x less writeback
    # than a (tb, 128) f32 slab.
    logits_t = jax.lax.dot_general(
        w4t_ref[...], h, (((1,), (1,)), ((), ())),
        preferred_element_type=jnp.float32) + b4t_ref[...]
    o_ref[...] = logits_t.astype(o_ref.dtype)


def prepare_params(params, elem_dtype=None):
    """Fold BN into the Linears, zero-pad narrow dims, cast for the MXU.

    Call ONCE and cache the result; the jitted forward takes it as a pytree so the
    fold/pad/cast never re-materializes in the hot path.
    """
    if elem_dtype is None:
        elem_dtype = _default_elem_dtype()
    (W1, b1, s1, t1), (W2, b2, s2, t2), (W3, b3, s3, t3), (W4, b4) = params
    W1f, t1f = W1 * s1, b1 * s1 + t1
    W2f, t2f = W2 * s2, b2 * s2 + t2
    W3f, t3f = W3 * s3, b3 * s3 + t3
    # Pad layer-3 output 64 -> 128 (padded cols stay exactly 0 through the ReLU).
    W3p = jnp.pad(W3f, ((0, 0), (0, HIDDEN_PAD - W3f.shape[1])))
    t3p = jnp.pad(t3f, ((0, 0), (0, HIDDEN_PAD - t3f.shape[1])))
    # Head stored transposed: (NUM_CLASSES, 64) -> (8, 128); bias (8, 1) f32.
    W4tp = jnp.pad(W4.T, ((0, OUT_PAD_SUB - W4.shape[1]),
                          (0, HIDDEN_PAD - W4.shape[0])))
    b4tp = jnp.pad(b4.T, ((0, OUT_PAD_SUB - b4.shape[1]), (0, 0)))
    return (W1f.astype(jnp.bfloat16), t1f.astype(elem_dtype),
            W2f.astype(jnp.bfloat16), t2f.astype(elem_dtype),
            W3p.astype(jnp.bfloat16), t3p.astype(elem_dtype),
            W4tp.astype(jnp.bfloat16), b4tp.astype(jnp.float32))


@functools.partial(jax.jit, static_argnames=("tb",))
def emotion_net3_forward(x, prepared, *, tb=None):
    """x: [B, INPUT_DIM] float32; prepared: output of prepare_params.

    Returns logits [B, NUM_CLASSES] float32 (PyTorch eval-mode semantics).
    """
    B, D = x.shape
    tbp, Bp = _pick_batch_tile(B, tb)
    if Bp != B:
        x = jnp.pad(x, ((0, Bp - B), (0, 0)))

    x_spec = pl.BlockSpec((tbp, D), lambda i: (i, 0))
    param_specs = [pl.BlockSpec(p.shape, lambda i: (0, 0)) for p in prepared]
    out_spec = pl.BlockSpec((OUT_PAD_SUB, tbp), lambda i: (0, i))

    flops = 2 * Bp * (D * HIDDEN[0] + HIDDEN[0] * HIDDEN[1]
                      + HIDDEN[1] * HIDDEN_PAD + HIDDEN_PAD * OUT_PAD_SUB)
    param_bytes = sum(int(p.size) * p.dtype.itemsize for p in prepared)
    bytes_accessed = Bp * D * 4 + OUT_PAD_SUB * Bp * 4 + param_bytes

    out_t = pl.pallas_call(
        _mlp_kernel,
        out_shape=jax.ShapeDtypeStruct((OUT_PAD_SUB, Bp), jnp.float32),
        grid=(Bp // tbp,),
        in_specs=[x_spec, *param_specs],
        out_specs=out_spec,
        compiler_params=pltpu.CompilerParams(
            dimension_semantics=("parallel",),   # shard batch tiles across v7x's 2 TCs
            vmem_limit_bytes=32 << 20,           # working set <10 MiB even at tb=2048
        ),
        cost_estimate=pl.CostEstimate(
            flops=int(flops), transcendentals=0, bytes_accessed=int(bytes_accessed)),
    )(x, *prepared)
    return out_t[:NUM_CLASSES, :B].T


def init_params(key, input_dim=INPUT_DIM, num_classes=NUM_CLASSES):
    """Deterministic synthetic parameters matching EmotionNet3's shapes.

    Linear(d_in, d_out): W [d_in, d_out] (transposed vs. PyTorch's [out, in]),
    bias b [1, d_out]. BatchNorm1d(d_out) in eval mode (running_mean=0,
    running_var=1): scale s = gamma / sqrt(var + eps), shift t = beta - mean * s.
    """
    dims = [input_dim, *HIDDEN, num_classes]
    params = []
    for li in range(4):
        d_in, d_out = dims[li], dims[li + 1]
        key, kw, kb, kg, kbeta = jax.random.split(key, 5)
        limit = 1.0 / jnp.sqrt(jnp.float32(d_in))
        W = jax.random.uniform(kw, (d_in, d_out), jnp.float32, -limit, limit)
        b = jax.random.uniform(kb, (1, d_out), jnp.float32, -limit, limit)
        if li < 3:
            gamma = 1.0 + 0.01 * jax.random.normal(kg, (1, d_out), jnp.float32)
            beta = 0.01 * jax.random.normal(kbeta, (1, d_out), jnp.float32)
            running_mean = jnp.zeros((1, d_out), jnp.float32)
            running_var = jnp.ones((1, d_out), jnp.float32)
            s = gamma / jnp.sqrt(running_var + BN_EPS)
            t = beta - running_mean * s
            params.append((W, b, s, t))
        else:
            params.append((W, b))
    return params


def reference_forward(x, params):
    """Pure-JAX f32 reference (exact eval-mode semantics, no bf16)."""
    h = x
    for li, p in enumerate(params):
        if li < 3:
            W, b, s, t = p
            h = jnp.maximum((h @ W + b) * s + t, 0.0)
        else:
            W, b = p
            h = h @ W + b
    return h


def reference_forward_kernel_numerics(x, prepared):
    """Pure-JAX reference replicating the kernel's exact op order / dtypes."""
    w1, t1, w2, t2, w3, t3, w4t, b4t = prepared

    def act(acc, t):
        return jnp.maximum(acc.astype(t.dtype) + t, 0).astype(jnp.bfloat16)

    h = act(jnp.dot(x.astype(jnp.bfloat16), w1, preferred_element_type=jnp.float32), t1)
    h = act(jnp.dot(h, w2, preferred_element_type=jnp.float32), t2)
    h = act(jnp.dot(h, w3, preferred_element_type=jnp.float32), t3)
    logits_t = jax.lax.dot_general(
        w4t, h, (((1,), (1,)), ((), ())), preferred_element_type=jnp.float32) + b4t
    return logits_t[:NUM_CLASSES, :].T


if __name__ == "__main__":
    key = jax.random.PRNGKey(0)
    params = init_params(jax.random.PRNGKey(0))
    prepared = prepare_params(params)          # fold/pad/cast once, outside hot path

    key, kx = jax.random.split(key)
    B = 8
    x = jax.random.normal(kx, (B, INPUT_DIM), jnp.float32)

    out = jax.block_until_ready(emotion_net3_forward(x, prepared))
    assert out.shape == (B, NUM_CLASSES)

    # Exact-numerics check (same bf16 weights / op order / f32 accumulation).
    ref_kn = reference_forward_kernel_numerics(x, prepared)
    assert jnp.allclose(out, ref_kn, atol=1e-3, rtol=1e-3)
    # Loose check against the full-f32 eval-mode reference (bf16 quantization).
    ref_f32 = reference_forward(x, params)
    assert jnp.allclose(out, ref_f32, atol=5e-2, rtol=5e-2)

    # Exercise the multi-tile grid + ragged last tile path (B not a tile multiple).
    key, kx2 = jax.random.split(key)
    x2 = jax.random.normal(kx2, (300, INPUT_DIM), jnp.float32)
    out2 = jax.block_until_ready(emotion_net3_forward(x2, prepared, tb=128))
    assert out2.shape == (300, NUM_CLASSES)
    assert jnp.allclose(out2, reference_forward_kernel_numerics(x2, prepared),
                        atol=1e-3, rtol=1e-3)

    # Exercise the automatic large-batch tiling (grid of several lane-aligned tiles).
    key, kx3 = jax.random.split(key)
    x3 = jax.random.normal(kx3, (600, INPUT_DIM), jnp.float32)
    out3 = jax.block_until_ready(emotion_net3_forward(x3, prepared))
    assert out3.shape == (600, NUM_CLASSES)
    assert jnp.allclose(out3, reference_forward_kernel_numerics(x3, prepared),
                        atol=1e-3, rtol=1e-3)

    print("KERNEL_OK")
</pallas_src>

<mosaic_0001>
module attributes {stable_mosaic.version = 11 : i64} {
  func.func @_mlp_kernel(%arg0: i32, %arg1: memref<8x32xf32, #tpu.memory_space<vmem>>, %arg2: memref<32x256xbf16, #tpu.memory_space<vmem>>, %arg3: memref<1x256xf32, #tpu.memory_space<vmem>>, %arg4: memref<256x128xbf16, #tpu.memory_space<vmem>>, %arg5: memref<1x128xf32, #tpu.memory_space<vmem>>, %arg6: memref<128x128xbf16, #tpu.memory_space<vmem>>, %arg7: memref<1x128xf32, #tpu.memory_space<vmem>>, %arg8: memref<8x128xbf16, #tpu.memory_space<vmem>>, %arg9: memref<8x1xf32, #tpu.memory_space<vmem>>, %arg10: memref<8x8xf32, #tpu.memory_space<vmem>>) attributes {dimension_semantics = [#tpu.dimension_semantics<parallel>], iteration_bounds = array<i64: 1>, scalar_prefetch = 0 : i64, scratch_operands = 0 : i64, tpu.core_type = #tpu.core_type<tc>, window_params = [{transform_indices = @transform_0, window_bounds = array<i64: 8, 32>}, {pipeline_mode = #tpu.pipeline_mode<synchronous>, transform_indices = @transform_1, window_bounds = array<i64: 32, 256>}, {pipeline_mode = #tpu.pipeline_mode<synchronous>, transform_indices = @transform_2, window_bounds = array<i64: 1, 256>}, {pipeline_mode = #tpu.pipeline_mode<synchronous>, transform_indices = @transform_3, window_bounds = array<i64: 256, 128>}, {pipeline_mode = #tpu.pipeline_mode<synchronous>, transform_indices = @transform_4, window_bounds = array<i64: 1, 128>}, {pipeline_mode = #tpu.pipeline_mode<synchronous>, transform_indices = @transform_5, window_bounds = array<i64: 128, 128>}, {pipeline_mode = #tpu.pipeline_mode<synchronous>, transform_indices = @transform_6, window_bounds = array<i64: 1, 128>}, {pipeline_mode = #tpu.pipeline_mode<synchronous>, transform_indices = @transform_7, window_bounds = array<i64: 8, 128>}, {pipeline_mode = #tpu.pipeline_mode<synchronous>, transform_indices = @transform_8, window_bounds = array<i64: 8, 1>}, {transform_indices = @transform_9, window_bounds = array<i64: 8, 8>}]} {
    %c0 = arith.constant 0 : index
    %c0_0 = arith.constant 0 : index
    %0 = vector.load %arg1[%c0, %c0_0] : memref<8x32xf32, #tpu.memory_space<vmem>>, vector<8x32xf32>
    %1 = arith.truncf %0 : vector<8x32xf32> to vector<8x32xbf16>
    %c0_1 = arith.constant 0 : index
    %c0_2 = arith.constant 0 : index
    %2 = vector.load %arg2[%c0_1, %c0_2] : memref<32x256xbf16, #tpu.memory_space<vmem>>, vector<32x256xbf16>
    %cst = arith.constant dense<0.000000e+00> : vector<8x256xf32>
    %3 = tpu.matmul %1, %2, %cst {dimension_numbers = #tpu.dot_dimension_numbers<[1], [0], [0], [1], [0, 0, 1, 1], [], []>} : vector<8x32xbf16>, vector<32x256xbf16>, vector<8x256xf32> -> vector<8x256xf32>
    %c0_3 = arith.constant 0 : index
    %c0_4 = arith.constant 0 : index
    %4 = vector.load %arg3[%c0_3, %c0_4] : memref<1x256xf32, #tpu.memory_space<vmem>>, vector<1x256xf32>
    %5 = vector.broadcast %4 : vector<1x256xf32> to vector<8x256xf32>
    %6 = arith.addf %3, %5 : vector<8x256xf32>
    %cst_5 = arith.constant 0.000000e+00 : f32
    %7 = vector.broadcast %cst_5 : f32 to vector<8x256xf32>
    %8 = arith.maximumf %6, %7 : vector<8x256xf32>
    %9 = arith.truncf %8 : vector<8x256xf32> to vector<8x256xbf16>
    %c0_6 = arith.constant 0 : index
    %c0_7 = arith.constant 0 : index
    %10 = vector.load %arg4[%c0_6, %c0_7] : memref<256x128xbf16, #tpu.memory_space<vmem>>, vector<256x128xbf16>
    %cst_8 = arith.constant dense<0.000000e+00> : vector<8x128xf32>
    %11 = tpu.matmul %9, %10, %cst_8 {dimension_numbers = #tpu.dot_dimension_numbers<[1], [0], [0], [1], [0, 0, 1, 1], [], []>} : vector<8x256xbf16>, vector<256x128xbf16>, vector<8x128xf32> -> vector<8x128xf32>
    %c0_9 = arith.constant 0 : index
    %c0_10 = arith.constant 0 : index
    %12 = vector.load %arg5[%c0_9, %c0_10] : memref<1x128xf32, #tpu.memory_space<vmem>>, vector<1x128xf32>
    %13 = vector.broadcast %12 : vector<1x128xf32> to vector<8x128xf32>
    %14 = arith.addf %11, %13 : vector<8x128xf32>
    %cst_11 = arith.constant 0.000000e+00 : f32
    %15 = vector.broadcast %cst_11 : f32 to vector<8x128xf32>
    %16 = arith.maximumf %14, %15 : vector<8x128xf32>
    %17 = arith.truncf %16 : vector<8x128xf32> to vector<8x128xbf16>
    %c0_12 = arith.constant 0 : index
    %c0_13 = arith.constant 0 : index
    %18 = vector.load %arg6[%c0_12, %c0_13] : memref<128x128xbf16, #tpu.memory_space<vmem>>, vector<128x128xbf16>
    %cst_14 = arith.constant dense<0.000000e+00> : vector<8x128xf32>
    %19 = tpu.matmul %17, %18, %cst_14 {dimension_numbers = #tpu.dot_dimension_numbers<[1], [0], [0], [1], [0, 0, 1, 1], [], []>} : vector<8x128xbf16>, vector<128x128xbf16>, vector<8x128xf32> -> vector<8x128xf32>
    %c0_15 = arith.constant 0 : index
    %c0_16 = arith.constant 0 : index
    %20 = vector.load %arg7[%c0_15, %c0_16] : memref<1x128xf32, #tpu.memory_space<vmem>>, vector<1x128xf32>
    %21 = vector.broadcast %20 : vector<1x128xf32> to vector<8x128xf32>
    %22 = arith.addf %19, %21 : vector<8x128xf32>
    %cst_17 = arith.constant 0.000000e+00 : f32
    %23 = vector.broadcast %cst_17 : f32 to vector<8x128xf32>
    %24 = arith.maximumf %22, %23 : vector<8x128xf32>
    %25 = arith.truncf %24 : vector<8x128xf32> to vector<8x128xbf16>
    %c0_18 = arith.constant 0 : index
    %c0_19 = arith.constant 0 : index
    %26 = vector.load %arg8[%c0_18, %c0_19] : memref<8x128xbf16, #tpu.memory_space<vmem>>, vector<8x128xbf16>
    %cst_20 = arith.constant dense<0.000000e+00> : vector<8x8xf32>
    %27 = tpu.matmul %26, %25, %cst_20 {dimension_numbers = #tpu.dot_dimension_numbers<[1], [1], [0], [0], [0, 0, 1, 0], [], []>} : vector<8x128xbf16>, vector<8x128xbf16>, vector<8x8xf32> -> vector<8x8xf32>
    %c0_21 = arith.constant 0 : index
    %c0_22 = arith.constant 0 : index
    %28 = vector.load %arg9[%c0_21, %c0_22] : memref<8x1xf32, #tpu.memory_space<vmem>>, vector<8x1xf32>
    %29 = vector.broadcast %28 : vector<8x1xf32> to vector<8x8xf32>
    %30 = arith.addf %27, %29 : vector<8x8xf32>
    %c0_23 = arith.constant 0 : index
    %c0_24 = arith.constant 0 : index
    %31 = vector.load %arg10[%c0_23, %c0_24] : memref<8x8xf32, #tpu.memory_space<vmem>>, vector<8x8xf32>
    tpu.vector_store %arg10[%c0_23, %c0_24], %30 {strides = array<i32>} : memref<8x8xf32, #tpu.memory_space<vmem>>, vector<8x8xf32>,
    return
  }
  func.func @transform_0(%arg0: i32) -> (i32, i32) {
    %c0_i32 = arith.constant 0 : i32
    %c0_i32_0 = arith.constant 0 : i32
    return %arg0, %c0_i32 : i32, i32
  }
  func.func @transform_1(%arg0: i32) -> (i32, i32) {
    %c0_i32 = arith.constant 0 : i32
    %c0_i32_0 = arith.constant 0 : i32
    %c0_i32_1 = arith.constant 0 : i32
    return %c0_i32, %c0_i32_0 : i32, i32
  }
  func.func @transform_2(%arg0: i32) -> (i32, i32) {
    %c0_i32 = arith.constant 0 : i32
    %c0_i32_0 = arith.constant 0 : i32
    %c0_i32_1 = arith.constant 0 : i32
    return %c0_i32, %c0_i32_0 : i32, i32
  }
  func.func @transform_3(%arg0: i32) -> (i32, i32) {
    %c0_i32 = arith.constant 0 : i32
    %c0_i32_0 = arith.constant 0 : i32
    %c0_i32_1 = arith.constant 0 : i32
    return %c0_i32, %c0_i32_0 : i32, i32
  }
  func.func @transform_4(%arg0: i32) -> (i32, i32) {
    %c0_i32 = arith.constant 0 : i32
    %c0_i32_0 = arith.constant 0 : i32
    %c0_i32_1 = arith.constant 0 : i32
    return %c0_i32, %c0_i32_0 : i32, i32
  }
  func.func @transform_5(%arg0: i32) -> (i32, i32) {
    %c0_i32 = arith.constant 0 : i32
    %c0_i32_0 = arith.constant 0 : i32
    %c0_i32_1 = arith.constant 0 : i32
    return %c0_i32, %c0_i32_0 : i32, i32
  }
  func.func @transform_6(%arg0: i32) -> (i32, i32) {
    %c0_i32 = arith.constant 0 : i32
    %c0_i32_0 = arith.constant 0 : i32
    %c0_i32_1 = arith.constant 0 : i32
    return %c0_i32, %c0_i32_0 : i32, i32
  }
  func.func @transform_7(%arg0: i32) -> (i32, i32) {
    %c0_i32 = arith.constant 0 : i32
    %c0_i32_0 = arith.constant 0 : i32
    %c0_i32_1 = arith.constant 0 : i32
    return %c0_i32, %c0_i32_0 : i32, i32
  }
  func.func @transform_8(%arg0: i32) -> (i32, i32) {
    %c0_i32 = arith.constant 0 : i32
    %c0_i32_0 = arith.constant 0 : i32
    %c0_i32_1 = arith.constant 0 : i32
    return %c0_i32, %c0_i32_0 : i32, i32
  }
  func.func @transform_9(%arg0: i32) -> (i32, i32) {
    %c0_i32 = arith.constant 0 : i32
    %c0_i32_0 = arith.constant 0 : i32
    return %c0_i32, %arg0 : i32, i32
  }
}

</mosaic_0001>

<llo_original>
// kernel: emotion_net3_forward.1
$region0: #{emotion_net3_forward.1}
  #allocation0 [shape = 'u32[]', space=smem, size = 0x4, offset = 0x4, fixed_abs, tag = 'smem constant byte address 0x4 - core index']
  #allocation1 [shape = 'u32[72,128]{1,0:T(1,128)}', space=vmem, size = 0x9000, scoped, tag = 'internal scratch']
  %s0 = inlined_call_operand.vmem [shape: f32[8,32], index: 0, kind: input, shape index: {}]
  %s1 = inlined_call_operand.hbm [shape: bf16[32,256], index: 1, kind: input, shape index: {}]
  %s2 = inlined_call_operand.hbm [shape: f32[1,256], index: 2, kind: input, shape index: {}]
  %s3 = inlined_call_operand.hbm [shape: bf16[256,128], index: 3, kind: input, shape index: {}]
  %s4 = inlined_call_operand.hbm [shape: f32[1,128], index: 4, kind: input, shape index: {}]
  %s5 = inlined_call_operand.hbm [shape: bf16[128,128], index: 5, kind: input, shape index: {}]
  %s6 = inlined_call_operand.vmem [shape: f32[1,128], index: 6, kind: input, shape index: {}]
  %s7 = inlined_call_operand.vmem [shape: bf16[8,128], index: 7, kind: input, shape index: {}]
  %s8 = inlined_call_operand.vmem [shape: f32[8,1], index: 8, kind: input, shape index: {}]
  %s9 = inlined_call_operand.vmem [shape: f32[8,8], index: 9, kind: output, shape index: {}]
  %s10 = sld [smem:[#allocation0]]
  $region66: #{emotion_net3_forward.1} parent=0
    _
  %s12 = ssub.s32 1, %s10
  %s13 = scalar_select 0, %s12, %s10
  $region1: #{emotion_net3_forward.1} parent=0
    #allocation2 [shape = 'u8[16384]{0}', space=vmem, size = 0x4000, scoped, tag = 'input window, operand 1, single buffered']
    #allocation3 [shape = 's32[1]{0}', space=sflag, size = 0x4, scoped, tag = 'scoped memory for emotion_net3_forward.1']
    #allocation4 [shape = 'u8[1024]{0}', space=vmem, size = 0x400, scoped, tag = 'input window, operand 2, single buffered']
    #allocation5 [shape = 's32[1]{0}', space=sflag, size = 0x4, scoped, tag = 'scoped memory for emotion_net3_forward.1']
    #allocation6 [shape = 'u8[65536]{0}', space=vmem, size = 0x10000, scoped, tag = 'input window, operand 3, single buffered']
    #allocation7 [shape = 'u8[512]{0}', space=vmem, size = 0x400, scoped, tag = 'input window, operand 4, single buffered']
    #allocation8 [shape = 's32[1]{0}', space=sflag, size = 0x4, scoped, tag = 'scoped memory for emotion_net3_forward.1']
    #allocation9 [shape = 'u8[32768]{0}', space=vmem, size = 0x8000, scoped, tag = 'input window, operand 5, single buffered']
    %14 = vsyncpa [#allocation3], 0
    %15 = vsyncpa [#allocation5], 0
    %16 = vsyncpa [#allocation8], 0
    // Predicated region
    $region2: #{emotion_net3_forward.1} parent=1 // pred_check
      _
    $region3: #{emotion_net3_forward.1} parent=1 // pred_check_branch
      %18 = sbr.rel (0) target = $region5
    $region4: #{emotion_net3_forward.1} parent=1 // pred_region
      _
    $region5: #{emotion_net3_forward.1} parent=1 // pred_fallthru
      _
    // Predicated region
    $region6: #{emotion_net3_forward.1} parent=1 // pred_check
      _
    $region7: #{emotion_net3_forward.1} parent=1 // pred_check_branch
      %20 = sbr.rel (0) target = $region9
    $region8: #{emotion_net3_forward.1} parent=1 // pred_region
      %22 = vsyncadd [#allocation3], 0
      %s23 = sshll.u32 %s1, 4
      %s24 = int_to_ptr.hbm [resolvable:$true] %s23
      %s25 = sshll.u32 [#allocation2], 4
      %s26 = int_to_ptr.vmem [resolvable:$true] %s25
      %31 = dma.hbm_to_vmem [thread:$0]  %s24, 512, %s26, [#allocation3], 128, 128, 8
    $region9: #{emotion_net3_forward.1} parent=1 // pred_fallthru
      _
    // Predicated region
    $region10: #{emotion_net3_forward.1} parent=1 // pred_check
      _
    $region11: #{emotion_net3_forward.1} parent=1 // pred_check_branch
      %33 = sbr.rel (0) target = $region13
    $region12: #{emotion_net3_forward.1} parent=1 // pred_region
      %35 = vsyncadd [#allocation5], 0
      %s37 = sshll.u32 %s2, 4
      %s38 = int_to_ptr.hbm [resolvable:$true] %s37
      %s39 = sshll.u32 [#allocation4], 4
      %s40 = int_to_ptr.vmem [resolvable:$true] %s39
      %42 = dma.hbm_to_vmem [thread:$0]  %s38, 32, %s40, [#allocation5]
    $region13: #{emotion_net3_forward.1} parent=1 // pred_fallthru
      _
    // Predicated region
    $region14: #{emotion_net3_forward.1} parent=1 // pred_check
      _
    $region15: #{emotion_net3_forward.1} parent=1 // pred_check_branch
      %44 = sbr.rel (0) target = $region17
    $region16: #{emotion_net3_forward.1} parent=1 // pred_region
      %46 = vsyncadd [#allocation5], 0
      %s47 = sshll.u32 %s3, 4
      %s48 = int_to_ptr.hbm [resolvable:$true] %s47
      %s49 = sshll.u32 [#allocation6], 4
      %s50 = int_to_ptr.vmem [resolvable:$true] %s49
      %55 = dma.hbm_to_vmem [thread:$0]  %s48, 2048, %s50, [#allocation5], 64, 64, 4
    $region17: #{emotion_net3_forward.1} parent=1 // pred_fallthru
      _
    // Predicated region
    $region18: #{emotion_net3_forward.1} parent=1 // pred_check
      _
    $region19: #{emotion_net3_forward.1} parent=1 // pred_check_branch
      %57 = sbr.rel (0) target = $region21
    $region20: #{emotion_net3_forward.1} parent=1 // pred_region
      %59 = vsyncadd [#allocation8], 0
      %s61 = sshll.u32 %s4, 4
      %s62 = int_to_ptr.hbm [resolvable:$true] %s61
      %s63 = sshll.u32 [#allocation7], 4
      %s64 = int_to_ptr.vmem [resolvable:$true] %s63
      %66 = dma.hbm_to_vmem [thread:$0]  %s62, 16, %s64, [#allocation8]
    $region21: #{emotion_net3_forward.1} parent=1 // pred_fallthru
      _
    // Predicated region
    $region22: #{emotion_net3_forward.1} parent=1 // pred_check
      _
    $region23: #{emotion_net3_forward.1} parent=1 // pred_check_branch
      %68 = sbr.rel (0) target = $region25
    $region24: #{emotion_net3_forward.1} parent=1 // pred_region
      %70 = vsyncadd [#allocation8], 0
      %s71 = sshll.u32 %s5, 4
      %s72 = int_to_ptr.hbm [resolvable:$true] %s71
      %s73 = sshll.u32 [#allocation9], 4
      %s74 = int_to_ptr.vmem [resolvable:$true] %s73
      %79 = dma.hbm_to_vmem [thread:$0]  %s72, 1024, %s74, [#allocation8], 64, 64, 4
    $region25: #{emotion_net3_forward.1} parent=1 // pred_fallthru
      _
    // Predicated region
    $region26: #{emotion_net3_forward.1} parent=1 // pred_check
      _
    $region27: #{emotion_net3_forward.1} parent=1 // pred_check_branch
      %81 = sbr.rel (0) target = $region29
    $region28: #{emotion_net3_forward.1} parent=1 // pred_region
      _
    $region29: #{emotion_net3_forward.1} parent=1 // pred_fallthru
      _
    // Predicated region
    $region30: #{emotion_net3_forward.1} parent=1 // pred_check
      _
    $region31: #{emotion_net3_forward.1} parent=1 // pred_check_branch
      %83 = sbr.rel (0) target = $region33
    $region32: #{emotion_net3_forward.1} parent=1 // pred_region
      _
    $region33: #{emotion_net3_forward.1} parent=1 // pred_fallthru
      _
    // Predicated region
    $region34: #{emotion_net3_forward.1} parent=1 // pred_check
      _
    $region35: #{emotion_net3_forward.1} parent=1 // pred_check_branch
      %85 = sbr.rel (0) target = $region37
    $region36: #{emotion_net3_forward.1} parent=1 // pred_region
      _
    $region37: #{emotion_net3_forward.1} parent=1 // pred_fallthru
      _
    // Predicated region
    $region38: #{emotion_net3_forward.1} parent=1 // pred_check
      _
    $region39: #{emotion_net3_forward.1} parent=1 // pred_check_branch
      %87 = sbr.rel (0) target = $region41
    $region40: #{emotion_net3_forward.1} parent=1 // pred_region
      %89 = dma.done [#allocation3], 512
    $region41: #{emotion_net3_forward.1} parent=1 // pred_fallthru
      _
    // Predicated region
    $region42: #{emotion_net3_forward.1} parent=1 // pred_check
      _
    $region43: #{emotion_net3_forward.1} parent=1 // pred_check_branch
      %91 = sbr.rel (0) target = $region45
    $region44: #{emotion_net3_forward.1} parent=1 // pred_region
      %93 = dma.done [#allocation5], 32
    $region45: #{emotion_net3_forward.1} parent=1 // pred_fallthru
      _
    // Predicated region
    $region46: #{emotion_net3_forward.1} parent=1 // pred_check
      _
    $region47: #{emotion_net3_forward.1} parent=1 // pred_check_branch
      %95 = sbr.rel (0) target = $region49
    $region48: #{emotion_net3_forward.1} parent=1 // pred_region
      %97 = dma.done [#allocation5], 2048
    $region49: #{emotion_net3_forward.1} parent=1 // pred_fallthru
      _
    // Predicated region
    $region50: #{emotion_net3_forward.1} parent=1 // pred_check
      _
    $region51: #{emotion_net3_forward.1} parent=1 // pred_check_branch
      %99 = sbr.rel (0) target = $region53
    $region52: #{emotion_net3_forward.1} parent=1 // pred_region
      %101 = dma.done [#allocation8], 16
    $region53: #{emotion_net3_forward.1} parent=1 // pred_fallthru
      _
    // Predicated region
    $region54: #{emotion_net3_forward.1} parent=1 // pred_check
      _
    $region55: #{emotion_net3_forward.1} parent=1 // pred_check_branch
      %103 = sbr.rel (0) target = $region57
    $region56: #{emotion_net3_forward.1} parent=1 // pred_region
      %105 = dma.done [#allocation8], 1024
    $region57: #{emotion_net3_forward.1} parent=1 // pred_fallthru
      _
    %v107 = vld [vmem:[%s0] sm:$0xff]
    %v108 = vpack.c.bf16 %v107, %v107
    %v109 = vld [vmem:[#allocation2] sm:$0xff]
    %v110 = vld [vmem:[#allocation2 + $0x8] sm:$0xff]
    %v111 = vld [vmem:[#allocation2 + $0x10] sm:$0xff]
    %v112 = vld [vmem:[#allocation2 + $0x18] sm:$0xff]
    %v113 = vld [vmem:[#allocation4] sm:$0x3]
    %v115 = vperm.slane %v113, 0
    %v116 = vperm.slane %v113, 1
    %v123 = vunpack.c.l.b16 %v109
    %v124 = vunpack.c.h.b16 %v109
    %v125 = vunpack.c.l.b16 %v110
    %v126 = vunpack.c.h.b16 %v110
    %v127 = vunpack.c.l.b16 %v111
    %v128 = vunpack.c.h.b16 %v111
    %v129 = vunpack.c.l.b16 %v112
    %v130 = vunpack.c.h.b16 %v112
    %v131 = vpack.c.b16 %v125, %v123
    %v132 = vpack.c.b16 %v126, %v124
    %v133 = vpack.c.b16 %v129, %v127
    %v134 = vpack.c.b16 %v130, %v128
    %vm139 = vcmask 261120
    %v141 = vsel %vm139, %v108, 0
    %143 = vmatpush.bf16.msra.mxu0 0
    %144 = vmatpush.bf16.msra.mxu0 0
    %145 = vmatpush.bf16.msra.mxu0 0
    %146 = vmatpush.bf16.msra.mxu0 0
    %147 = vmatpush.bf16.msra.mxu0 0
    %148 = vmatpush.bf16.msra.mxu0 0
    %149 = vmatpush.bf16.msra.mxu0 %v133
    %150 = vmatpush.bf16.msra.mxu0 %v131
    %151 = vmatmul.bf16.gmra.mxu0 %v141
    %v152 = vpop.f32.mrf.mxu0
    %v153 = vadd.f32 %v115, %v152
    %v154 = vpop.f32.mrf.mxu0
    %155 = vdwg.mxu0
    %156 = vmatpush.bf16.msra.mxu0 0
    %157 = vmatpush.bf16.msra.mxu0 0
    %158 = vmatpush.bf16.msra.mxu0 0
    %159 = vmatpush.bf16.msra.mxu0 0
    %160 = vmatpush.bf16.msra.mxu0 0
    %161 = vmatpush.bf16.msra.mxu0 0
    %162 = vmatpush.bf16.msra.mxu0 %v134
    %163 = vmatpush.bf16.msra.mxu0 %v132
    %164 = vmatmul.bf16.gmra.mxu0 %v141
    %v165 = vpop.f32.mrf.mxu0
    %v166 = vadd.f32 %v116, %v165
    %v167 = vpop.f32.mrf.mxu0
    %168 = vdwg.mxu0
    %v169 = vmax.f32 %v153, 0.0
    %v170 = vmax.f32 %v166, 0.0
    %v171 = vpack.c.bf16 %v169, %v169
    %v172 = vpack.c.bf16 %v170, %v170
    %v173 = vld [vmem:[#allocation6] sm:$0xf]
    %v174 = vld [vmem:[#allocation6 + $0x4] sm:$0xf]
    %v175 = vld [vmem:[#allocation6 + $0x8] sm:$0xf]
    %v176 = vld [vmem:[#allocation6 + $0xc] sm:$0xf]
    %v177 = vld [vmem:[#allocation6 + $0x10] sm:$0xf]
    %v178 = vld [vmem:[#allocation6 + $0x14] sm:$0xf]
    %v179 = vld [vmem:[#allocation6 + $0x18] sm:$0xf]
    %v180 = vld [vmem:[#allocation6 + $0x1c] sm:$0xf]
    %v181 = vld [vmem:[#allocation6 + $0x20] sm:$0xf]
    %v182 = vld [vmem:[#allocation6 + $0x24] sm:$0xf]
    %v183 = vld [vmem:[#allocation6 + $0x28] sm:$0xf]
    %v184 = vld [vmem:[#allocation6 + $0x2c] sm:$0xf]
    %v185 = vld [vmem:[#allocation6 + $0x30] sm:$0xf]
    %v186 = vld [vmem:[#allocation6 + $0x34] sm:$0xf]
    %v187 = vld [vmem:[#allocation6 + $0x38] sm:$0xf]
    %v188 = vld [vmem:[#allocation6 + $0x3c] sm:$0xf]
    %v189 = vld [vmem:[#allocation6 + $0x40] sm:$0xf]
    %v190 = vld [vmem:[#allocation6 + $0x44] sm:$0xf]
    %v191 = vld [vmem:[#allocation6 + $0x48] sm:$0xf]
    %v192 = vld [vmem:[#allocation6 + $0x4c] sm:$0xf]
    %v193 = vld [vmem:[#allocation6 + $0x50] sm:$0xf]
    %v194 = vld [vmem:[#allocation6 + $0x54] sm:$0xf]
    %v195 = vld [vmem:[#allocation6 + $0x58] sm:$0xf]
    %v196 = vld [vmem:[#allocation6 + $0x5c] sm:$0xf]
    %v197 = vld [vmem:[#allocation6 + $0x60] sm:$0xf]
    %v198 = vld [vmem:[#allocation6 + $0x64] sm:$0xf]
    %v199 = vld [vmem:[#allocation6 + $0x68] sm:$0xf]
    %v200 = vld [vmem:[#allocation6 + $0x6c] sm:$0xf]
    %v201 = vld [vmem:[#allocation6 + $0x70] sm:$0xf]
    %v202 = vld [vmem:[#allocation6 + $0x74] sm:$0xf]
    %v203 = vld [vmem:[#allocation6 + $0x78] sm:$0xf]
    %v204 = vld [vmem:[#allocation6 + $0x7c] sm:$0xf]
    %v205 = vld [vmem:[#allocation7] sm:$0x1]
    %v207 = vperm.slane %v205, 0
    %v241 = vunpack.c.l.b16 %v173
    %v242 = vunpack.c.l.b16 %v174
    %v243 = vunpack.c.l.b16 %v175
    %v244 = vunpack.c.l.b16 %v176
    %v245 = vunpack.c.l.b16 %v177
    %v246 = vunpack.c.l.b16 %v178
    %v247 = vunpack.c.l.b16 %v179
    %v248 = vunpack.c.l.b16 %v180
    %v249 = vunpack.c.l.b16 %v181
    %v250 = vunpack.c.l.b16 %v182
    %v251 = vunpack.c.l.b16 %v183
    %v252 = vunpack.c.l.b16 %v184
    %v253 = vunpack.c.l.b16 %v185
    %v254 = vunpack.c.l.b16 %v186
    %v255 = vunpack.c.l.b16 %v187
    %v256 = vunpack.c.l.b16 %v188
    %v257 = vunpack.c.l.b16 %v189
    %v258 = vunpack.c.l.b16 %v190
    %v259 = vunpack.c.l.b16 %v191
    %v260 = vunpack.c.l.b16 %v192
    %v261 = vunpack.c.l.b16 %v193
    %v262 = vunpack.c.l.b16 %v194
    %v263 = vunpack.c.l.b16 %v195
    %v264 = vunpack.c.l.b16 %v196
    %v265 = vunpack.c.l.b16 %v197
    %v266 = vunpack.c.l.b16 %v198
    %v267 = vunpack.c.l.b16 %v199
    %v268 = vunpack.c.l.b16 %v200
    %v269 = vunpack.c.l.b16 %v201
    %v270 = vunpack.c.l.b16 %v202
    %v271 = vunpack.c.l.b16 %v203
    %v272 = vunpack.c.l.b16 %v204
    %v273 = vpack.c.b16 %v242, %v241
    %v274 = vpack.c.b16 %v244, %v243
    %v275 = vpack.c.b16 %v246, %v245
    %v276 = vpack.c.b16 %v248, %v247
    %v277 = vpack.c.b16 %v250, %v249
    %v278 = vpack.c.b16 %v252, %v251
    %v279 = vpack.c.b16 %v254, %v253
    %v280 = vpack.c.b16 %v256, %v255
    %v281 = vpack.c.b16 %v258, %v257
    %v282 = vpack.c.b16 %v260, %v259
    %v283 = vpack.c.b16 %v262, %v261
    %v284 = vpack.c.b16 %v264, %v263
    %v285 = vpack.c.b16 %v266, %v265
    %v286 = vpack.c.b16 %v268, %v267
    %v287 = vpack.c.b16 %v270, %v269
    %v288 = vpack.c.b16 %v272, %v271
    %305 = vmatpush.bf16.msra.mxu0 %v280
    %306 = vmatpush.bf16.msra.mxu0 %v279
    %307 = vmatpush.bf16.msra.mxu0 %v278
    %308 = vmatpush.bf16.msra.mxu0 %v277
    %309 = vmatpush.bf16.msra.mxu0 %v276
    %310 = vmatpush.bf16.msra.mxu0 %v275
    %311 = vmatpush.bf16.msra.mxu0 %v274
    %312 = vmatpush.bf16.msra.mxu0 %v273
    %313 = vmatmul.bf16.gmra.mxu0 %v171
    %v314 = vpop.f32.mrf.mxu0
    %v315 = vadd.f32 %v207, %v314
    %v316 = vpop.f32.mrf.mxu0
    %317 = vdwg.mxu0
    %318 = vmatpush.bf16.msra.mxu0 %v288
    %319 = vmatpush.bf16.msra.mxu0 %v287
    %320 = vmatpush.bf16.msra.mxu0 %v286
    %321 = vmatpush.bf16.msra.mxu0 %v285
    %322 = vmatpush.bf16.msra.mxu0 %v284
    %323 = vmatpush.bf16.msra.mxu0 %v283
    %324 = vmatpush.bf16.msra.mxu0 %v282
    %325 = vmatpush.bf16.msra.mxu0 %v281
    %326 = vmatmul.bf16.gmra.mxu0 %v172
    %v327 = vpop.f32.mrf.mxu0
    %v328 = vadd.f32 %v315, %v327
    %v329 = vpop.f32.mrf.mxu0
    %330 = vdwg.mxu0
    %v331 = vmax.f32 %v328, 0.0
    %v332 = vpack.c.bf16 %v331, %v331
    %v333 = vld [vmem:[#allocation9] sm:$0xf]
    %v334 = vld [vmem:[#allocation9 + $0x4] sm:$0xf]
    %v335 = vld [vmem:[#allocation9 + $0x8] sm:$0xf]
    %v336 = vld [vmem:[#allocation9 + $0xc] sm:$0xf]
    %v337 = vld [vmem:[#allocation9 + $0x10] sm:$0xf]
    %v338 = vld [vmem:[#allocation9 + $0x14] sm:$0xf]
    %v339 = vld [vmem:[#allocation9 + $0x18] sm:$0xf]
    %v340 = vld [vmem:[#allocation9 + $0x1c] sm:$0xf]
    %v341 = vld [vmem:[#allocation9 + $0x20] sm:$0xf]
    %v342 = vld [vmem:[#allocation9 + $0x24] sm:$0xf]
    %v343 = vld [vmem:[#allocation9 + $0x28] sm:$0xf]
    %v344 = vld [vmem:[#allocation9 + $0x2c] sm:$0xf]
    %v345 = vld [vmem:[#allocation9 + $0x30] sm:$0xf]
    %v346 = vld [vmem:[#allocation9 + $0x34] sm:$0xf]
    %v347 = vld [vmem:[#allocation9 + $0x38] sm:$0xf]
    %v348 = vld [vmem:[#allocation9 + $0x3c] sm:$0xf]
    %v349 = vld [vmem:[%s6] sm:$0x1]
    %v351 = vperm.slane %v349, 0
    %v369 = vunpack.c.l.b16 %v333
    %v370 = vunpack.c.l.b16 %v334
    %v371 = vunpack.c.l.b16 %v335
    %v372 = vunpack.c.l.b16 %v336
    %v373 = vunpack.c.l.b16 %v337
    %v374 = vunpack.c.l.b16 %v338
    %v375 = vunpack.c.l.b16 %v339
    %v376 = vunpack.c.l.b16 %v340
    %v377 = vunpack.c.l.b16 %v341
    %v378 = vunpack.c.l.b16 %v342
    %v379 = vunpack.c.l.b16 %v343
    %v380 = vunpack.c.l.b16 %v344
    %v381 = vunpack.c.l.b16 %v345
    %v382 = vunpack.c.l.b16 %v346
    %v383 = vunpack.c.l.b16 %v347
    %v384 = vunpack.c.l.b16 %v348
    %v385 = vpack.c.b16 %v370, %v369
    %v386 = vpack.c.b16 %v372, %v371
    %v387 = vpack.c.b16 %v374, %v373
    %v388 = vpack.c.b16 %v376, %v375
    %v389 = vpack.c.b16 %v378, %v377
    %v390 = vpack.c.b16 %v380, %v379
    %v391 = vpack.c.b16 %v382, %v381
    %v392 = vpack.c.b16 %v384, %v383
    %401 = vmatpush.bf16.msra.mxu0 %v392
    %402 = vmatpush.bf16.msra.mxu0 %v391
    %403 = vmatpush.bf16.msra.mxu0 %v390
    %404 = vmatpush.bf16.msra.mxu0 %v389
    %405 = vmatpush.bf16.msra.mxu0 %v388
    %406 = vmatpush.bf16.msra.mxu0 %v387
    %407 = vmatpush.bf16.msra.mxu0 %v386
    %408 = vmatpush.bf16.msra.mxu0 %v385
    %409 = vmatmul.bf16.gmra.mxu0 %v332
    %v410 = vpop.f32.mrf.mxu0
    %v411 = vadd.f32 %v351, %v410
    %v412 = vpop.f32.mrf.mxu0
    %413 = vdwg.mxu0
    %v414 = vmax.f32 %v411, 0.0
    %v415 = vpack.c.bf16 %v414, %v414
    %v416 = vld [vmem:[%s7] sm:$0xf]
    %v417 = vld [vmem:[%s8] sm:$0xff]
    %419 = vset.pattern.permute.xlu0 0
    %420 = vperm.xlu0 %419, %v417
    %v421 = vpop.permute.xlu0 %420
    %423 = vmatpush.bf16.xpose.msra.mxu0 0
    %424 = vmatpush.bf16.xpose.msra.mxu0 0
    %425 = vmatpush.bf16.xpose.msra.mxu0 0
    %426 = vmatpush.bf16.xpose.msra.mxu0 0
    %427 = vmatpush.bf16.xpose.msra.mxu0 0
    %428 = vmatpush.bf16.xpose.msra.mxu0 0
    %429 = vmatpush.bf16.xpose.msra.mxu0 0
    %430 = vmatpush.bf16.xpose.msra.mxu0 %v415
    %431 = vmatmul.bf16.gmra.mxu0 %v416
    %v432 = vpop.f32.mrf.mxu0
    %v433 = vadd.f32 %v421, %v432
    %v434 = vpop.f32.mrf.mxu0
    %435 = vdwg.mxu0
    %vm436 = vcmask 64512
    %437 = vst.msk [vmem:[%s9] sm:$0xff] %vm436, %v433
    // Predicated region
    $region58: #{emotion_net3_forward.1} parent=1 // pred_check
      _
    $region59: #{emotion_net3_forward.1} parent=1 // pred_check_branch
      %439 = sbr.rel (0) target = $region61
    $region60: #{emotion_net3_forward.1} parent=1 // pred_region
      _
    $region61: #{emotion_net3_forward.1} parent=1 // pred_fallthru
      _
    // Predicated region
    $region62: #{emotion_net3_forward.1} parent=1 // pred_check
      _
    $region63: #{emotion_net3_forward.1} parent=1 // pred_check_branch
      %441 = sbr.rel (0) target = $region65
    $region64: #{emotion_net3_forward.1} parent=1 // pred_region
      _
    $region65: #{emotion_net3_forward.1} parent=1 // pred_fallthru
      _
    %442 = vsyncpa [#allocation3], 1
    %443 = vsyncpa [#allocation5], 1
    %444 = vsyncpa [#allocation8], 1

</llo_original>
